<compile_context>
chip_gen: v6e
topology: v6e:2x2x1
jax: 0.10.0
libtpu: 0.0.40
codegen_flags: <defaults>
</compile_context>

<pallas_src>
import jax
import jax.numpy as jnp
from jax import lax
from jax.experimental import pallas as pl
from jax.experimental.pallas import tpu as pltpu


def _cdiv(a, b):
    return (a + b - 1) // b


def _round_up(a, b):
    return _cdiv(a, b) * b


def _make_conv_stats_kernel(c_sizes, k, l_tile, l_out, mxu_dtype):
    """Phase-1 kernel factory: conv (per-tap MXU matmuls) + per-tile BN partials."""
    n_in = len(c_sizes)
    c_off = [0]
    for c in c_sizes:
        c_off.append(c_off[-1] + c)

    def kernel(*refs):
        cur_refs = refs[:n_in]                  # (1, Ci, Lt)   current L tile
        halo_refs = refs[n_in:2 * n_in]         # (1, Ci, 128)  next 128 columns
        w_ref = refs[2 * n_in]                  # (k, Cout, Cin)
        y_ref = refs[2 * n_in + 1]              # (1, Cout, Lt) raw conv out (f32)
        st_ref = refs[2 * n_in + 2]             # (1, 1, Cout, 2) per-tile sum/sumsq

        j = pl.program_id(1)

        # Accumulate taps straight into the VMEM-resident output block
        # (bounded register pressure, no Python-carried big accumulator).
        y_ref[...] = jnp.zeros_like(y_ref)
        for i in range(n_in):                   # static -> unrolled
            ci = c_sizes[i]
            cur = cur_refs[i][0]                # (Ci, Lt)
            if k > 1:
                halo = halo_refs[i][0, :, :k - 1]                 # (Ci, k-1)
                xh = jnp.concatenate([cur, halo], axis=-1)        # (Ci, Lt+k-1)
            else:
                xh = cur
            for t in range(k):                  # static -> unrolled
                wt = w_ref[t, :, c_off[i]:c_off[i] + ci]          # (Cout, Ci)
                rhs = xh[:, t:t + l_tile]                         # (Ci, Lt)
                y_ref[0] += jnp.dot(
                    wt.astype(mxu_dtype), rhs.astype(mxu_dtype),
                    preferred_element_type=jnp.float32)

        # Single-sweep BN partials; mask columns past the true output length so
        # length padding never pollutes the statistics.
        acc = y_ref[0]                                            # (Cout, Lt) f32
        col = j * l_tile + lax.broadcasted_iota(jnp.int32, (1, l_tile), 1)
        acc_m = jnp.where(col < l_out, acc, 0.0)
        ssum = jnp.sum(acc_m, axis=-1, keepdims=True)             # (Cout, 1)
        ssq = jnp.sum(acc_m * acc_m, axis=-1, keepdims=True)      # (Cout, 1)
        st_ref[0, 0] = jnp.concatenate([ssum, ssq], axis=-1)      # (Cout, 2)

    return kernel


def _bn_relu_kernel(y_ref, scale_ref, shift_ref, o_ref):
    """Phase-2 kernel: lane-dense per-channel affine (folded BN) + ReLU."""
    y = y_ref[0]                                                  # (Cout, Lt) f32
    o_ref[0] = jnp.maximum(
        y * scale_ref[...] + shift_ref[...], 0.0).astype(o_ref.dtype)


def aggr_block_forward(xs, weight, gamma, beta, kernel_size, *,
                       mxu_dtype=jnp.float32, l_tile=None, eps=1e-5):
    """xs: list of (N, C_i, L) NCL arrays; weight: (Cout, Cin, k); gamma/beta: (Cout,)."""
    N, _, L = xs[0].shape
    c_sizes = [int(x.shape[1]) for x in xs]
    cin = sum(c_sizes)
    cout, w_cin, k = weight.shape
    assert w_cin == cin and k == kernel_size
    assert k - 1 <= 128, "halo block covers at most 128 columns"
    pad = (k - 1) // 2
    l_out = L + 2 * pad - (k - 1)

    # Length-axis tile: multiple of 128 (dense lane stores), capped at 512 so the
    # double-buffered (sum(Ci) + 2*Cout) * Lt * 4B working set stays far below the
    # scoped-VMEM limit on every generation (v7x: 32 MiB default of 64 MiB).
    if l_tile is None:
        l_tile = min(512, _round_up(max(l_out, 1), 128))
    assert l_tile % 128 == 0
    n_lt = _cdiv(l_out, l_tile)
    lp = (n_lt + 1) * l_tile      # padded input length (conv pad + halo slack)

    # One zero-pad of the length axis per input (left conv padding + right slack
    # so the halo block of the last tile is always in range).
    # TODO(synk): fold this pad and the final crop into in-kernel boundary
    # masking to remove the last pieces of host-side glue.
    xs_p = [jnp.pad(x.astype(jnp.float32), ((0, 0), (0, 0), (pad, lp - pad - L)))
            for x in xs]
    w_taps = jnp.transpose(weight.astype(jnp.float32), (2, 0, 1))   # (k, Cout, Cin)

    hb = l_tile // 128            # halo block index stride (128-col blocks)
    grid = (N, n_lt)
    parallel = pltpu.CompilerParams(
        dimension_semantics=("parallel", "parallel"))

    in_specs = []
    for c in c_sizes:             # current L tile of every input
        in_specs.append(pl.BlockSpec((1, c, l_tile), lambda n, j: (n, 0, j)))
    for c in c_sizes:             # next 128 columns (conv halo) of every input
        in_specs.append(
            pl.BlockSpec((1, c, 128), lambda n, j: (n, 0, (j + 1) * hb)))
    in_specs.append(pl.BlockSpec((k, cout, cin), lambda n, j: (0, 0, 0)))

    conv, stats = pl.pallas_call(
        _make_conv_stats_kernel(c_sizes, k, l_tile, l_out, mxu_dtype),
        grid=grid,
        in_specs=in_specs,
        out_specs=(
            pl.BlockSpec((1, cout, l_tile), lambda n, j: (n, 0, j)),
            pl.BlockSpec((1, 1, cout, 2), lambda n, j: (n, j, 0, 0)),
        ),
        out_shape=(
            jax.ShapeDtypeStruct((N, cout, n_lt * l_tile), jnp.float32),
            jax.ShapeDtypeStruct((N, n_lt, cout, 2), jnp.float32),
        ),
        compiler_params=parallel,
    )(*xs_p, *xs_p, w_taps)

    # Tiny host-side combine of per-tile partials -> folded BN scale/shift.
    cnt = float(N * l_out)
    ssum = jnp.sum(stats[..., 0], axis=(0, 1))                    # (Cout,)
    ssq = jnp.sum(stats[..., 1], axis=(0, 1))
    mean = ssum / cnt
    var = jnp.maximum(ssq / cnt - mean * mean, 0.0)               # biased variance
    rstd = lax.rsqrt(var + eps)
    g32 = gamma.astype(jnp.float32)
    scale = (g32 * rstd).reshape(cout, 1)
    shift = (beta.astype(jnp.float32) - mean * g32 * rstd).reshape(cout, 1)

    out = pl.pallas_call(
        _bn_relu_kernel,
        grid=grid,
        in_specs=[
            pl.BlockSpec((1, cout, l_tile), lambda n, j: (n, 0, j)),
            pl.BlockSpec((cout, 1), lambda n, j: (0, 0)),
            pl.BlockSpec((cout, 1), lambda n, j: (0, 0)),
        ],
        out_specs=pl.BlockSpec((1, cout, l_tile), lambda n, j: (n, 0, j)),
        out_shape=jax.ShapeDtypeStruct((N, cout, n_lt * l_tile), jnp.float32),
        compiler_params=parallel,
    )(conv, scale, shift)

    return out[:, :, :l_out]      # crop length padding; already NCL (PyTorch layout)


def _reference(xs, weight, gamma, beta, kernel_size):
    """Pure-JAX reference (conv + training-mode BN + ReLU)."""
    x = jnp.concatenate(xs, axis=1)
    pad = (kernel_size - 1) // 2
    y = lax.conv_general_dilated(
        x, weight, window_strides=(1,), padding=[(pad, pad)],
        dimension_numbers=("NCH", "OIH", "NCH"))
    mean = jnp.mean(y, axis=(0, 2), keepdims=True)
    var = jnp.mean((y - mean) ** 2, axis=(0, 2), keepdims=True)
    y = (y - mean) * lax.rsqrt(var + 1e-5)
    y = y * gamma.reshape(1, -1, 1) + beta.reshape(1, -1, 1)
    return jnp.maximum(y, 0.0)


if __name__ == "__main__":
    keys = jax.random.split(jax.random.PRNGKey(0), 6)

    # ---- Config 1: small example matching the module defaults --------------
    N, C1, C2, L, Cout, K = 2, 2, 2, 16, 8, 3
    Cin = C1 + C2
    x1 = jax.random.normal(keys[0], (N, C1, L), jnp.float32)
    x2 = jax.random.normal(keys[1], (N, C2, L), jnp.float32)
    w = jax.random.normal(keys[2], (Cout, Cin, K), jnp.float32) / jnp.sqrt(Cin * K)
    g = jnp.ones((Cout,), jnp.float32)
    b = jnp.zeros((Cout,), jnp.float32)

    out = jax.block_until_ready(aggr_block_forward([x1, x2], w, g, b, K))
    ref = _reference([x1, x2], w, g, b, K)
    assert out.shape == ref.shape == (N, Cout, L), (out.shape, ref.shape)
    assert jnp.allclose(out, ref, atol=1e-4, rtol=1e-4), "config-1 mismatch"

    # bf16 MXU operands (recommended on v6e/v7x), f32 accumulation: looser tol.
    out_bf16 = jax.block_until_ready(
        aggr_block_forward([x1, x2], w, g, b, K, mxu_dtype=jnp.bfloat16))
    assert jnp.allclose(out_bf16, ref, atol=1e-1, rtol=1e-1), "bf16 mismatch"

    # ---- Config 2: multi-tile length axis, k=5 (exercises halo & masking) --
    N2, C1b, C2b, L2, Cout2, K2 = 2, 3, 5, 300, 16, 5
    Cin2 = C1b + C2b
    x1b = jax.random.normal(keys[3], (N2, C1b, L2), jnp.float32)
    x2b = jax.random.normal(keys[4], (N2, C2b, L2), jnp.float32)
    wb = jax.random.normal(keys[5], (Cout2, Cin2, K2), jnp.float32) / jnp.sqrt(Cin2 * K2)
    gb = jnp.linspace(0.5, 1.5, Cout2, dtype=jnp.float32)
    bb = jnp.linspace(-0.2, 0.2, Cout2, dtype=jnp.float32)

    out2 = jax.block_until_ready(
        aggr_block_forward([x1b, x2b], wb, gb, bb, K2, l_tile=128))
    ref2 = _reference([x1b, x2b], wb, gb, bb, K2)
    assert out2.shape == ref2.shape == (N2, Cout2, L2), (out2.shape, ref2.shape)
    assert jnp.allclose(out2, ref2, atol=1e-4, rtol=1e-4), "config-2 mismatch"

    print("KERNEL_OK")
</pallas_src>

<mosaic_0001>
module attributes {stable_mosaic.version = 11 : i64} {
  func.func @kernel(%arg0: i32, %arg1: i32, %arg2: memref<1x2x128xf32, #tpu.memory_space<vmem>>, %arg3: memref<1x2x128xf32, #tpu.memory_space<vmem>>, %arg4: memref<1x2x128xf32, #tpu.memory_space<vmem>>, %arg5: memref<1x2x128xf32, #tpu.memory_space<vmem>>, %arg6: memref<3x8x4xf32, #tpu.memory_space<vmem>>, %arg7: memref<1x8x128xf32, #tpu.memory_space<vmem>>, %arg8: memref<1x1x8x2xf32, #tpu.memory_space<vmem>>) attributes {dimension_semantics = [#tpu.dimension_semantics<parallel>, #tpu.dimension_semantics<parallel>], iteration_bounds = array<i64: 2, 1>, scalar_prefetch = 0 : i64, scratch_operands = 0 : i64, tpu.core_type = #tpu.core_type<tc>, window_params = [{transform_indices = @transform_0, window_bounds = array<i64: 1, 2, 128>}, {transform_indices = @transform_1, window_bounds = array<i64: 1, 2, 128>}, {transform_indices = @transform_2, window_bounds = array<i64: 1, 2, 128>}, {transform_indices = @transform_3, window_bounds = array<i64: 1, 2, 128>}, {pipeline_mode = #tpu.pipeline_mode<synchronous>, transform_indices = @transform_4, window_bounds = array<i64: 3, 8, 4>}, {transform_indices = @transform_5, window_bounds = array<i64: 1, 8, 128>}, {transform_indices = @transform_6, window_bounds = array<i64: 1, 1, 8, 2>}]} {
    %cst = arith.constant 0.000000e+00 : f32
    %0 = vector.broadcast %cst : f32 to vector<1x8x128xf32>
    %c0 = arith.constant 0 : index
    %c0_0 = arith.constant 0 : index
    %c0_1 = arith.constant 0 : index
    %1 = vector.load %arg7[%c0, %c0_0, %c0_1] : memref<1x8x128xf32, #tpu.memory_space<vmem>>, vector<1x8x128xf32>
    tpu.vector_store %arg7[%c0, %c0_0, %c0_1], %0 {strides = array<i32>} : memref<1x8x128xf32, #tpu.memory_space<vmem>>, vector<1x8x128xf32>,
    %c0_2 = arith.constant 0 : index
    %c0_3 = arith.constant 0 : index
    %c0_4 = arith.constant 0 : index
    %2 = vector.load %arg2[%c0_2, %c0_3, %c0_4] : memref<1x2x128xf32, #tpu.memory_space<vmem>>, vector<1x2x128xf32>
    %3 = vector.shape_cast %2 : vector<1x2x128xf32> to vector<2x128xf32>
    %c0_5 = arith.constant 0 : index
    %c0_6 = arith.constant 0 : index
    %c0_7 = arith.constant 0 : index
    %4 = vector.load %arg4[%c0_5, %c0_6, %c0_7] : memref<1x2x128xf32, #tpu.memory_space<vmem>>, vector<1x2x2xf32>
    %5 = vector.shape_cast %4 : vector<1x2x2xf32> to vector<2x2xf32>
    %6 = tpu.concatenate %3, %5 in 1 : vector<2x128xf32>, vector<2x2xf32> -> vector<2x130xf32>
    %c0_8 = arith.constant 0 : index
    %c0_9 = arith.constant 0 : index
    %c0_10 = arith.constant 0 : index
    %7 = vector.load %arg6[%c0_8, %c0_9, %c0_10] : memref<3x8x4xf32, #tpu.memory_space<vmem>>, vector<1x8x2xf32>
    %8 = vector.shape_cast %7 : vector<1x8x2xf32> to vector<8x2xf32>
    %9 = vector.extract_strided_slice %6 {offsets = [0, 0], sizes = [2, 128], strides = [1, 1]} : vector<2x130xf32> to vector<2x128xf32>
    %c0_11 = arith.constant 0 : index
    %c0_12 = arith.constant 0 : index
    %c0_13 = arith.constant 0 : index
    %10 = vector.load %arg7[%c0_11, %c0_12, %c0_13] : memref<1x8x128xf32, #tpu.memory_space<vmem>>, vector<1x8x128xf32>
    %11 = vector.shape_cast %10 : vector<1x8x128xf32> to vector<8x128xf32>
    %cst_14 = arith.constant dense<0.000000e+00> : vector<8x128xf32>
    %12 = tpu.matmul %8, %9, %cst_14 {dimension_numbers = #tpu.dot_dimension_numbers<[1], [0], [0], [1], [0, 0, 1, 1], [], []>} : vector<8x2xf32>, vector<2x128xf32>, vector<8x128xf32> -> vector<8x128xf32>
    %13 = arith.addf %11, %12 : vector<8x128xf32>
    %c0_15 = arith.constant 0 : index
    %c0_16 = arith.constant 0 : index
    %c0_17 = arith.constant 0 : index
    %14 = vector.load %arg7[%c0_15, %c0_16, %c0_17] : memref<1x8x128xf32, #tpu.memory_space<vmem>>, vector<1x8x128xf32>
    %15 = vector.shape_cast %14 : vector<1x8x128xf32> to vector<8x128xf32>
    %16 = vector.shape_cast %13 : vector<8x128xf32> to vector<1x8x128xf32>
    tpu.vector_store %arg7[%c0_15, %c0_16, %c0_17], %16 {strides = array<i32>} : memref<1x8x128xf32, #tpu.memory_space<vmem>>, vector<1x8x128xf32>,
    %c1 = arith.constant 1 : index
    %c0_18 = arith.constant 0 : index
    %c0_19 = arith.constant 0 : index
    %17 = vector.load %arg6[%c1, %c0_18, %c0_19] : memref<3x8x4xf32, #tpu.memory_space<vmem>>, vector<1x8x2xf32>
    %18 = vector.shape_cast %17 : vector<1x8x2xf32> to vector<8x2xf32>
    %19 = vector.extract_strided_slice %6 {offsets = [0, 1], sizes = [2, 128], strides = [1, 1]} : vector<2x130xf32> to vector<2x128xf32>
    %c0_20 = arith.constant 0 : index
    %c0_21 = arith.constant 0 : index
    %c0_22 = arith.constant 0 : index
    %20 = vector.load %arg7[%c0_20, %c0_21, %c0_22] : memref<1x8x128xf32, #tpu.memory_space<vmem>>, vector<1x8x128xf32>
    %21 = vector.shape_cast %20 : vector<1x8x128xf32> to vector<8x128xf32>
    %cst_23 = arith.constant dense<0.000000e+00> : vector<8x128xf32>
    %22 = tpu.matmul %18, %19, %cst_23 {dimension_numbers = #tpu.dot_dimension_numbers<[1], [0], [0], [1], [0, 0, 1, 1], [], []>} : vector<8x2xf32>, vector<2x128xf32>, vector<8x128xf32> -> vector<8x128xf32>
    %23 = arith.addf %21, %22 : vector<8x128xf32>
    %c0_24 = arith.constant 0 : index
    %c0_25 = arith.constant 0 : index
    %c0_26 = arith.constant 0 : index
    %24 = vector.load %arg7[%c0_24, %c0_25, %c0_26] : memref<1x8x128xf32, #tpu.memory_space<vmem>>, vector<1x8x128xf32>
    %25 = vector.shape_cast %24 : vector<1x8x128xf32> to vector<8x128xf32>
    %26 = vector.shape_cast %23 : vector<8x128xf32> to vector<1x8x128xf32>
    tpu.vector_store %arg7[%c0_24, %c0_25, %c0_26], %26 {strides = array<i32>} : memref<1x8x128xf32, #tpu.memory_space<vmem>>, vector<1x8x128xf32>,
    %c2 = arith.constant 2 : index
    %c0_27 = arith.constant 0 : index
    %c0_28 = arith.constant 0 : index
    %27 = vector.load %arg6[%c2, %c0_27, %c0_28] : memref<3x8x4xf32, #tpu.memory_space<vmem>>, vector<1x8x2xf32>
    %28 = vector.shape_cast %27 : vector<1x8x2xf32> to vector<8x2xf32>
    %29 = vector.extract_strided_slice %6 {offsets = [0, 2], sizes = [2, 128], strides = [1, 1]} : vector<2x130xf32> to vector<2x128xf32>
    %c0_29 = arith.constant 0 : index
    %c0_30 = arith.constant 0 : index
    %c0_31 = arith.constant 0 : index
    %30 = vector.load %arg7[%c0_29, %c0_30, %c0_31] : memref<1x8x128xf32, #tpu.memory_space<vmem>>, vector<1x8x128xf32>
    %31 = vector.shape_cast %30 : vector<1x8x128xf32> to vector<8x128xf32>
    %cst_32 = arith.constant dense<0.000000e+00> : vector<8x128xf32>
    %32 = tpu.matmul %28, %29, %cst_32 {dimension_numbers = #tpu.dot_dimension_numbers<[1], [0], [0], [1], [0, 0, 1, 1], [], []>} : vector<8x2xf32>, vector<2x128xf32>, vector<8x128xf32> -> vector<8x128xf32>
    %33 = arith.addf %31, %32 : vector<8x128xf32>
    %c0_33 = arith.constant 0 : index
    %c0_34 = arith.constant 0 : index
    %c0_35 = arith.constant 0 : index
    %34 = vector.load %arg7[%c0_33, %c0_34, %c0_35] : memref<1x8x128xf32, #tpu.memory_space<vmem>>, vector<1x8x128xf32>
    %35 = vector.shape_cast %34 : vector<1x8x128xf32> to vector<8x128xf32>
    %36 = vector.shape_cast %33 : vector<8x128xf32> to vector<1x8x128xf32>
    tpu.vector_store %arg7[%c0_33, %c0_34, %c0_35], %36 {strides = array<i32>} : memref<1x8x128xf32, #tpu.memory_space<vmem>>, vector<1x8x128xf32>,
    %c0_36 = arith.constant 0 : index
    %c0_37 = arith.constant 0 : index
    %c0_38 = arith.constant 0 : index
    %37 = vector.load %arg3[%c0_36, %c0_37, %c0_38] : memref<1x2x128xf32, #tpu.memory_space<vmem>>, vector<1x2x128xf32>
    %38 = vector.shape_cast %37 : vector<1x2x128xf32> to vector<2x128xf32>
    %c0_39 = arith.constant 0 : index
    %c0_40 = arith.constant 0 : index
    %c0_41 = arith.constant 0 : index
    %39 = vector.load %arg5[%c0_39, %c0_40, %c0_41] : memref<1x2x128xf32, #tpu.memory_space<vmem>>, vector<1x2x2xf32>
    %40 = vector.shape_cast %39 : vector<1x2x2xf32> to vector<2x2xf32>
    %41 = tpu.concatenate %38, %40 in 1 : vector<2x128xf32>, vector<2x2xf32> -> vector<2x130xf32>
    %c0_42 = arith.constant 0 : index
    %c0_43 = arith.constant 0 : index
    %c2_44 = arith.constant 2 : index
    %42 = vector.load %arg6[%c0_42, %c0_43, %c2_44] : memref<3x8x4xf32, #tpu.memory_space<vmem>>, vector<1x8x2xf32>
    %43 = vector.shape_cast %42 : vector<1x8x2xf32> to vector<8x2xf32>
    %44 = vector.extract_strided_slice %41 {offsets = [0, 0], sizes = [2, 128], strides = [1, 1]} : vector<2x130xf32> to vector<2x128xf32>
    %c0_45 = arith.constant 0 : index
    %c0_46 = arith.constant 0 : index
    %c0_47 = arith.constant 0 : index
    %45 = vector.load %arg7[%c0_45, %c0_46, %c0_47] : memref<1x8x128xf32, #tpu.memory_space<vmem>>, vector<1x8x128xf32>
    %46 = vector.shape_cast %45 : vector<1x8x128xf32> to vector<8x128xf32>
    %cst_48 = arith.constant dense<0.000000e+00> : vector<8x128xf32>
    %47 = tpu.matmul %43, %44, %cst_48 {dimension_numbers = #tpu.dot_dimension_numbers<[1], [0], [0], [1], [0, 0, 1, 1], [], []>} : vector<8x2xf32>, vector<2x128xf32>, vector<8x128xf32> -> vector<8x128xf32>
    %48 = arith.addf %46, %47 : vector<8x128xf32>
    %c0_49 = arith.constant 0 : index
    %c0_50 = arith.constant 0 : index
    %c0_51 = arith.constant 0 : index
    %49 = vector.load %arg7[%c0_49, %c0_50, %c0_51] : memref<1x8x128xf32, #tpu.memory_space<vmem>>, vector<1x8x128xf32>
    %50 = vector.shape_cast %49 : vector<1x8x128xf32> to vector<8x128xf32>
    %51 = vector.shape_cast %48 : vector<8x128xf32> to vector<1x8x128xf32>
    tpu.vector_store %arg7[%c0_49, %c0_50, %c0_51], %51 {strides = array<i32>} : memref<1x8x128xf32, #tpu.memory_space<vmem>>, vector<1x8x128xf32>,
    %c1_52 = arith.constant 1 : index
    %c0_53 = arith.constant 0 : index
    %c2_54 = arith.constant 2 : index
    %52 = vector.load %arg6[%c1_52, %c0_53, %c2_54] : memref<3x8x4xf32, #tpu.memory_space<vmem>>, vector<1x8x2xf32>
    %53 = vector.shape_cast %52 : vector<1x8x2xf32> to vector<8x2xf32>
    %54 = vector.extract_strided_slice %41 {offsets = [0, 1], sizes = [2, 128], strides = [1, 1]} : vector<2x130xf32> to vector<2x128xf32>
    %c0_55 = arith.constant 0 : index
    %c0_56 = arith.constant 0 : index
    %c0_57 = arith.constant 0 : index
    %55 = vector.load %arg7[%c0_55, %c0_56, %c0_57] : memref<1x8x128xf32, #tpu.memory_space<vmem>>, vector<1x8x128xf32>
    %56 = vector.shape_cast %55 : vector<1x8x128xf32> to vector<8x128xf32>
    %cst_58 = arith.constant dense<0.000000e+00> : vector<8x128xf32>
    %57 = tpu.matmul %53, %54, %cst_58 {dimension_numbers = #tpu.dot_dimension_numbers<[1], [0], [0], [1], [0, 0, 1, 1], [], []>} : vector<8x2xf32>, vector<2x128xf32>, vector<8x128xf32> -> vector<8x128xf32>
    %58 = arith.addf %56, %57 : vector<8x128xf32>
    %c0_59 = arith.constant 0 : index
    %c0_60 = arith.constant 0 : index
    %c0_61 = arith.constant 0 : index
    %59 = vector.load %arg7[%c0_59, %c0_60, %c0_61] : memref<1x8x128xf32, #tpu.memory_space<vmem>>, vector<1x8x128xf32>
    %60 = vector.shape_cast %59 : vector<1x8x128xf32> to vector<8x128xf32>
    %61 = vector.shape_cast %58 : vector<8x128xf32> to vector<1x8x128xf32>
    tpu.vector_store %arg7[%c0_59, %c0_60, %c0_61], %61 {strides = array<i32>} : memref<1x8x128xf32, #tpu.memory_space<vmem>>, vector<1x8x128xf32>,
    %c2_62 = arith.constant 2 : index
    %c0_63 = arith.constant 0 : index
    %c2_64 = arith.constant 2 : index
    %62 = vector.load %arg6[%c2_62, %c0_63, %c2_64] : memref<3x8x4xf32, #tpu.memory_space<vmem>>, vector<1x8x2xf32>
    %63 = vector.shape_cast %62 : vector<1x8x2xf32> to vector<8x2xf32>
    %64 = vector.extract_strided_slice %41 {offsets = [0, 2], sizes = [2, 128], strides = [1, 1]} : vector<2x130xf32> to vector<2x128xf32>
    %c0_65 = arith.constant 0 : index
    %c0_66 = arith.constant 0 : index
    %c0_67 = arith.constant 0 : index
    %65 = vector.load %arg7[%c0_65, %c0_66, %c0_67] : memref<1x8x128xf32, #tpu.memory_space<vmem>>, vector<1x8x128xf32>
    %66 = vector.shape_cast %65 : vector<1x8x128xf32> to vector<8x128xf32>
    %cst_68 = arith.constant dense<0.000000e+00> : vector<8x128xf32>
    %67 = tpu.matmul %63, %64, %cst_68 {dimension_numbers = #tpu.dot_dimension_numbers<[1], [0], [0], [1], [0, 0, 1, 1], [], []>} : vector<8x2xf32>, vector<2x128xf32>, vector<8x128xf32> -> vector<8x128xf32>
    %68 = arith.addf %66, %67 : vector<8x128xf32>
    %c0_69 = arith.constant 0 : index
    %c0_70 = arith.constant 0 : index
    %c0_71 = arith.constant 0 : index
    %69 = vector.load %arg7[%c0_69, %c0_70, %c0_71] : memref<1x8x128xf32, #tpu.memory_space<vmem>>, vector<1x8x128xf32>
    %70 = vector.shape_cast %69 : vector<1x8x128xf32> to vector<8x128xf32>
    %71 = vector.shape_cast %68 : vector<8x128xf32> to vector<1x8x128xf32>
    tpu.vector_store %arg7[%c0_69, %c0_70, %c0_71], %71 {strides = array<i32>} : memref<1x8x128xf32, #tpu.memory_space<vmem>>, vector<1x8x128xf32>,
    %c0_72 = arith.constant 0 : index
    %c0_73 = arith.constant 0 : index
    %c0_74 = arith.constant 0 : index
    %72 = vector.load %arg7[%c0_72, %c0_73, %c0_74] : memref<1x8x128xf32, #tpu.memory_space<vmem>>, vector<1x8x128xf32>
    %73 = vector.shape_cast %72 : vector<1x8x128xf32> to vector<8x128xf32>
    %c128_i32 = arith.constant 128 : i32
    %74 = arith.muli %arg1, %c128_i32 : i32
    %75 = tpu.iota {dimensions = array<i32: 1>} : vector<1x128xi32>
    %76 = vector.broadcast %74 : i32 to vector<1x128xi32>
    %77 = arith.addi %76, %75 : vector<1x128xi32>
    %c16_i32 = arith.constant 16 : i32
    %78 = vector.broadcast %c16_i32 : i32 to vector<1x128xi32>
    %79 = arith.cmpi slt, %77, %78 : vector<1x128xi32>
    %cst_75 = arith.constant 0.000000e+00 : f32
    %80 = vector.shape_cast %79 : vector<1x128xi1> to vector<1x128xi1>
    %81 = vector.broadcast %80 : vector<1x128xi1> to vector<8x128xi1>
    %82 = vector.broadcast %cst_75 : f32 to vector<8x128xf32>
    %83 = arith.select %81, %73, %82 : vector<8x128xi1>, vector<8x128xf32>
    %cst_76 = arith.constant dense<0.000000e+00> : vector<8xf32>
    %84 = vector.multi_reduction <add>, %83, %cst_76 [1] : vector<8x128xf32> to vector<8xf32>
    %85 = vector.shape_cast %84 : vector<8xf32> to vector<8x1xf32>
    %86 = arith.mulf %83, %83 : vector<8x128xf32>
    %cst_77 = arith.constant dense<0.000000e+00> : vector<8xf32>
    %87 = vector.multi_reduction <add>, %86, %cst_77 [1] : vector<8x128xf32> to vector<8xf32>
    %88 = vector.shape_cast %87 : vector<8xf32> to vector<8x1xf32>
    %89 = tpu.concatenate %85, %88 in 1 : vector<8x1xf32>, vector<8x1xf32> -> vector<8x2xf32>
    %c0_78 = arith.constant 0 : index
    %c0_79 = arith.constant 0 : index
    %c0_80 = arith.constant 0 : index
    %c0_81 = arith.constant 0 : index
    %90 = vector.load %arg8[%c0_78, %c0_79, %c0_80, %c0_81] : memref<1x1x8x2xf32, #tpu.memory_space<vmem>>, vector<1x1x8x2xf32>
    %91 = vector.shape_cast %90 : vector<1x1x8x2xf32> to vector<8x2xf32>
    %92 = vector.shape_cast %89 : vector<8x2xf32> to vector<1x1x8x2xf32>
    tpu.vector_store %arg8[%c0_78, %c0_79, %c0_80, %c0_81], %92 {strides = array<i32>} : memref<1x1x8x2xf32, #tpu.memory_space<vmem>>, vector<1x1x8x2xf32>,
    return
  }
  func.func @transform_0(%arg0: i32, %arg1: i32) -> (i32, i32, i32) {
    %c0_i32 = arith.constant 0 : i32
    %c0_i32_0 = arith.constant 0 : i32
    return %arg0, %c0_i32, %arg1 : i32, i32, i32
  }
  func.func @transform_1(%arg0: i32, %arg1: i32) -> (i32, i32, i32) {
    %c0_i32 = arith.constant 0 : i32
    %c0_i32_0 = arith.constant 0 : i32
    return %arg0, %c0_i32, %arg1 : i32, i32, i32
  }
  func.func @transform_2(%arg0: i32, %arg1: i32) -> (i32, i32, i32) {
    %c1_i32 = arith.constant 1 : i32
    %0 = arith.addi %arg1, %c1_i32 : i32
    %c1_i32_0 = arith.constant 1 : i32
    %1 = arith.muli %0, %c1_i32_0 : i32
    %c0_i32 = arith.constant 0 : i32
    %c0_i32_1 = arith.constant 0 : i32
    return %arg0, %c0_i32, %1 : i32, i32, i32
  }
  func.func @transform_3(%arg0: i32, %arg1: i32) -> (i32, i32, i32) {
    %c1_i32 = arith.constant 1 : i32
    %0 = arith.addi %arg1, %c1_i32 : i32
    %c1_i32_0 = arith.constant 1 : i32
    %1 = arith.muli %0, %c1_i32_0 : i32
    %c0_i32 = arith.constant 0 : i32
    %c0_i32_1 = arith.constant 0 : i32
    return %arg0, %c0_i32, %1 : i32, i32, i32
  }
  func.func @transform_4(%arg0: i32, %arg1: i32) -> (i32, i32, i32) {
    %c0_i32 = arith.constant 0 : i32
    %c0_i32_0 = arith.constant 0 : i32
    %c0_i32_1 = arith.constant 0 : i32
    %c0_i32_2 = arith.constant 0 : i32
    return %c0_i32, %c0_i32_0, %c0_i32_1 : i32, i32, i32
  }
  func.func @transform_5(%arg0: i32, %arg1: i32) -> (i32, i32, i32) {
    %c0_i32 = arith.constant 0 : i32
    %c0_i32_0 = arith.constant 0 : i32
    return %arg0, %c0_i32, %arg1 : i32, i32, i32
  }
  func.func @transform_6(%arg0: i32, %arg1: i32) -> (i32, i32, i32, i32) {
    %c0_i32 = arith.constant 0 : i32
    %c0_i32_0 = arith.constant 0 : i32
    %c0_i32_1 = arith.constant 0 : i32
    return %arg0, %arg1, %c0_i32, %c0_i32_0 : i32, i32, i32, i32
  }
}

</mosaic_0001>

<llo_original>
// kernel: tpu_custom_call.1
$region0: #{tpu_custom_call.1}
  #allocation0 [shape = 'u32[]', space=smem, size = 0x4, offset = 0x4, fixed_abs, tag = 'smem constant byte address 0x4 - core index']
  #allocation1 [shape = 'u32[144,128]{1,0:T(1,128)}', space=vmem, size = 0x12000, scoped, tag = 'internal scratch']
  %s0 = inlined_call_operand.vmem [shape: f32[2,2,256], index: 0, kind: input, shape index: {}]
  %s1 = inlined_call_operand.vmem [shape: f32[2,2,256], index: 1, kind: input, shape index: {}]
  %s2 = inlined_call_operand.vmem [shape: f32[2,2,256], index: 2, kind: input, shape index: {}]
  %s3 = inlined_call_operand.vmem [shape: f32[2,2,256], index: 3, kind: input, shape index: {}]
  %s4 = inlined_call_operand.vmem [shape: f32[3,8,4], index: 4, kind: input, shape index: {}]
  %s5 = inlined_call_operand.hbm [shape: f32[2,8,128], index: 5, kind: output, shape index: {0}]
  %s6 = inlined_call_operand.vmem [shape: f32[2,1,8,2], index: 6, kind: output, shape index: {1}]
  %7 = xla_tuple %s5, %s6
  %s8 = sld [smem:[#allocation0]]
  $region61: #{tpu_custom_call.1} parent=0
    _
  %s10 = ssub.s32 1, %s8
  %s11 = scalar_select 0, %s10, %s8
  $region1: #{tpu_custom_call.1} parent=0
    #allocation2 [shape = 'u8[8192]{0}', space=vmem, size = 0x2000, scoped, tag = 'output window, operand 0']
    #allocation3 [shape = 's32[2]{0}', space=sflag, size = 0x8, scoped, tag = 'scoped memory for tpu_custom_call.1']
    %12 = vsyncpa [#allocation3], 0
    %s13 = scalar_lea.sflag [#allocation3], 1
    %14 = vsyncpa %s13, 0
    loop: start=0, step=1, limit=4
    $region2: #{tpu_custom_call.1} parent=1 // loop_pre_header
      _
    $region3: #{tpu_custom_call.1} parent=1 // loop_header
      %s16 = sphi 0, %s20
      %p17 = scmp.ge.s32.totalorder %s16, 4
      %s23 = sphi 0, %s35
      %s24 = sphi 0, %s31
      %s25 = sphi 0, %s23
      %s26 = sphi 0, %s24
      %s27 = sphi 0, %s25
      %s28 = sphi 0, %s26
      %s40 = sphi 0, %s42
      %s43 = sphi 0, %s40
      %s44 = sphi 0, %s43
      %s60 = sphi 0, %s44
      %s68 = sphi 0, %s70
      %s71 = sphi 0, %s68
      %s72 = sphi 0, %s71
      %s88 = sphi 0, %s72
      %s98 = sphi 0, %s100
      %s101 = sphi 0, %s98
      %s102 = sphi 0, %s101
      %s118 = sphi 0, %s102
      %s128 = sphi 0, %s130
      %s131 = sphi 0, %s128
      %s132 = sphi 0, %s131
      %s148 = sphi 0, %s132
      %s152 = sphi 0, %s152
      %s154 = sphi 0, %s152
      %s155 = sphi 0, %s154
      %s169 = sphi 0, %s155
      %s177 = sphi 0, %s179
      %s180 = sphi 0, %s177
      %s181 = sphi 0, %s180
      %s197 = sphi 0, %s181
      %s205 = sphi 0, %s207
      %s208 = sphi 0, %s205
      %s209 = sphi 0, %s208
      %s225 = sphi 0, %s209
    $region4: #{tpu_custom_call.1} parent=1 // loop_header_branch
      %19 = sbr.rel (%p17) target = $region8
    $region5: #{tpu_custom_call.1} parent=1 // loop_body
      %s21 = ssub.s32 %s16, 1
      %s22 = ssub.s32 %s16, 2
      %s29 = sadd.s32 1, %s24
      %p30 = scmp.ge.s32.totalorder %s29, 1
      %s31 = scalar_select %p30, 0, %s29
      %s32 = sadd.s32 1, %s23
      %s33 = scalar_select %p30, %s32, %s23
      %p34 = scmp.ge.s32.totalorder %s33, 2
      %s35 = scalar_select %p34, 0, %s33
      %s36 = ssub.s32 %s23, %s35
      %s37 = ssub.s32 %s24, %s31
      %s38 = sor.u32 %s36, %s37
      %p39 = scmp.eq.s32.totalorder %s38, 0
      %s41 = sadd.s32 %s40, 1
      %s42 = scalar_select %p39, %s40, %s41
      %p45 = pneg %p39
      %p46 = scmp.eq.s32.totalorder %s16, 1
      %p47 = por %p45, %p46
      %p48 = scmp.ne.s32.totalorder %s40, %s43
      %p49 = scmp.eq.s32.totalorder %s16, 0
      %p50 = por %p48, %p49
      %p51 = scmp.ne.s32.totalorder %s40, %s43
      %p52 = scmp.eq.s32.totalorder %s21, 1
      %p53 = por %p51, %p52
      %p54 = scmp.ne.s32.totalorder %s43, %s44
      %p55 = scmp.eq.s32.totalorder %s21, 0
      %p56 = por %p54, %p55
      %p57 = scmp.ne.s32.totalorder %s43, %s44
      %p58 = scmp.eq.s32.totalorder %s22, 1
      %p59 = por %p57, %p58
      %p61 = scmp.ne.s32.totalorder %s44, %s60
      %p62 = scmp.eq.s32.totalorder %s22, 0
      %p63 = por %p61, %p62
      %s64 = ssub.s32 %s23, %s35
      %s65 = ssub.s32 %s24, %s31
      %s66 = sor.u32 %s64, %s65
      %p67 = scmp.eq.s32.totalorder %s66, 0
      %s69 = sadd.s32 %s68, 1
      %s70 = scalar_select %p67, %s68, %s69
      %p73 = pneg %p67
      %p74 = scmp.eq.s32.totalorder %s16, 1
      %p75 = por %p73, %p74
      %p76 = scmp.ne.s32.totalorder %s68, %s71
      %p77 = scmp.eq.s32.totalorder %s16, 0
      %p78 = por %p76, %p77
      %p79 = scmp.ne.s32.totalorder %s68, %s71
      %p80 = scmp.eq.s32.totalorder %s21, 1
      %p81 = por %p79, %p80
      %p82 = scmp.ne.s32.totalorder %s71, %s72
      %p83 = scmp.eq.s32.totalorder %s21, 0
      %p84 = por %p82, %p83
      %p85 = scmp.ne.s32.totalorder %s71, %s72
      %p86 = scmp.eq.s32.totalorder %s22, 1
      %p87 = por %p85, %p86
      %p89 = scmp.ne.s32.totalorder %s72, %s88
      %p90 = scmp.eq.s32.totalorder %s22, 0
      %p91 = por %p89, %p90
      %s92 = sadd.s32 %s24, 1
      %s93 = sadd.s32 %s31, 1
      %s94 = ssub.s32 %s23, %s35
      %s95 = ssub.s32 %s92, %s93
      %s96 = sor.u32 %s94, %s95
      %p97 = scmp.eq.s32.totalorder %s96, 0
      %s99 = sadd.s32 %s98, 1
      %s100 = scalar_select %p97, %s98, %s99
      %p103 = pneg %p97
      %p104 = scmp.eq.s32.totalorder %s16, 1
      %p105 = por %p103, %p104
      %p106 = scmp.ne.s32.totalorder %s98, %s101
      %p107 = scmp.eq.s32.totalorder %s16, 0
      %p108 = por %p106, %p107
      %p109 = scmp.ne.s32.totalorder %s98, %s101
      %p110 = scmp.eq.s32.totalorder %s21, 1
      %p111 = por %p109, %p110
      %p112 = scmp.ne.s32.totalorder %s101, %s102
      %p113 = scmp.eq.s32.totalorder %s21, 0
      %p114 = por %p112, %p113
      %p115 = scmp.ne.s32.totalorder %s101, %s102
      %p116 = scmp.eq.s32.totalorder %s22, 1
      %p117 = por %p115, %p116
      %p119 = scmp.ne.s32.totalorder %s102, %s118
      %p120 = scmp.eq.s32.totalorder %s22, 0
      %p121 = por %p119, %p120
      %s122 = sadd.s32 %s24, 1
      %s123 = sadd.s32 %s31, 1
      %s124 = ssub.s32 %s23, %s35
      %s125 = ssub.s32 %s122, %s123
      %s126 = sor.u32 %s124, %s125
      %p127 = scmp.eq.s32.totalorder %s126, 0
      %s129 = sadd.s32 %s128, 1
      %s130 = scalar_select %p127, %s128, %s129
      %p133 = pneg %p127
      %p134 = scmp.eq.s32.totalorder %s16, 1
      %p135 = por %p133, %p134
      %p136 = scmp.ne.s32.totalorder %s128, %s131
      %p137 = scmp.eq.s32.totalorder %s16, 0
      %p138 = por %p136, %p137
      %p139 = scmp.ne.s32.totalorder %s128, %s131
      %p140 = scmp.eq.s32.totalorder %s21, 1
      %p141 = por %p139, %p140
      %p142 = scmp.ne.s32.totalorder %s131, %s132
      %p143 = scmp.eq.s32.totalorder %s21, 0
      %p144 = por %p142, %p143
      %p145 = scmp.ne.s32.totalorder %s131, %s132
      %p146 = scmp.eq.s32.totalorder %s22, 1
      %p147 = por %p145, %p146
      %p149 = scmp.ne.s32.totalorder %s132, %s148
      %p150 = scmp.eq.s32.totalorder %s22, 0
      %p151 = por %p149, %p150
      %s153 = sadd.s32 %s152, 1
      %p156 = scmp.eq.s32.totalorder %s16, 1
      %p157 = scmp.ne.s32.totalorder %s152, %s154
      %p158 = scmp.eq.s32.totalorder %s16, 0
      %p159 = por %p157, %p158
      %p160 = scmp.ne.s32.totalorder %s152, %s154
      %p161 = scmp.eq.s32.totalorder %s21, 1
      %p162 = por %p160, %p161
      %p163 = scmp.ne.s32.totalorder %s154, %s155
      %p164 = scmp.eq.s32.totalorder %s21, 0
      %p165 = por %p163, %p164
      %p166 = scmp.ne.s32.totalorder %s154, %s155
      %p167 = scmp.eq.s32.totalorder %s22, 1
      %p168 = por %p166, %p167
      %p170 = scmp.ne.s32.totalorder %s155, %s169
      %p171 = scmp.eq.s32.totalorder %s22, 0
      %p172 = por %p170, %p171
      %s173 = ssub.s32 %s23, %s35
      %s174 = ssub.s32 %s24, %s31
      %s175 = sor.u32 %s173, %s174
      %p176 = scmp.eq.s32.totalorder %s175, 0
      %s178 = sadd.s32 %s177, 1
      %s179 = scalar_select %p176, %s177, %s178
      %p182 = pneg %p176
      %p183 = scmp.eq.s32.totalorder %s16, 1
      %p184 = por %p182, %p183
      %p185 = scmp.ne.s32.totalorder %s177, %s180
      %p186 = scmp.eq.s32.totalorder %s16, 0
      %p187 = por %p185, %p186
      %p188 = scmp.ne.s32.totalorder %s177, %s180
      %p189 = scmp.eq.s32.totalorder %s21, 1
      %p190 = por %p188, %p189
      %p191 = scmp.ne.s32.totalorder %s180, %s181
      %p192 = scmp.eq.s32.totalorder %s21, 0
      %p193 = por %p191, %p192
      %p194 = scmp.ne.s32.totalorder %s180, %s181
      %p195 = scmp.eq.s32.totalorder %s22, 1
      %p196 = por %p194, %p195
      %p198 = scmp.ne.s32.totalorder %s181, %s197
      %p199 = scmp.eq.s32.totalorder %s22, 0
      %p200 = por %p198, %p199
      %s201 = ssub.s32 %s23, %s35
      %s202 = ssub.s32 %s24, %s31
      %s203 = sor.u32 %s201, %s202
      %p204 = scmp.eq.s32.totalorder %s203, 0
      %s206 = sadd.s32 %s205, 1
      %s207 = scalar_select %p204, %s205, %s206
      %p210 = pneg %p204
      %p211 = scmp.eq.s32.totalorder %s16, 1
      %p212 = por %p210, %p211
      %p213 = scmp.ne.s32.totalorder %s205, %s208
      %p214 = scmp.eq.s32.totalorder %s16, 0
      %p215 = por %p213, %p214
      %p216 = scmp.ne.s32.totalorder %s205, %s208
      %p217 = scmp.eq.s32.totalorder %s21, 1
      %p218 = por %p216, %p217
      %p219 = scmp.ne.s32.totalorder %s208, %s209
      %p220 = scmp.eq.s32.totalorder %s21, 0
      %p221 = por %p219, %p220
      %p222 = scmp.ne.s32.totalorder %s208, %s209
      %p223 = scmp.eq.s32.totalorder %s22, 1
      %p224 = por %p222, %p223
      %p226 = scmp.ne.s32.totalorder %s209, %s225
      %p227 = scmp.eq.s32.totalorder %s22, 0
      %p228 = por %p226, %p227
      %p229 = scmp.le.s32.totalorder 1, %s16
      %p230 = scmp.lt.s32.totalorder %s16, 3
      %p231 = pnand %p229, %p230
      %p232 = pneg %p231
      // Predicated region
      $region9: #{tpu_custom_call.1} parent=5 // pred_check
        _
      $region10: #{tpu_custom_call.1} parent=5 // pred_check_branch
        %234 = sbr.rel (%p231) target = $region12
      $region11: #{tpu_custom_call.1} parent=5 // pred_region
        %s235 = ssub.s32 %s16, 1
        // Predicated region
        $region13: #{tpu_custom_call.1} parent=11 // pred_check
          %p236 = pneg %p165
        $region14: #{tpu_custom_call.1} parent=11 // pred_check_branch
          %238 = sbr.rel (%p236) target = $region16
        $region15: #{tpu_custom_call.1} parent=11 // pred_region
          _
        $region16: #{tpu_custom_call.1} parent=11 // pred_fallthru
          _
      $region12: #{tpu_custom_call.1} parent=5 // pred_fallthru
        _
      %p239 = scmp.lt.s32.totalorder %s16, 2
      // Predicated region
      $region17: #{tpu_custom_call.1} parent=5 // pred_check
        %p240 = pneg %p239
      $region18: #{tpu_custom_call.1} parent=5 // pred_check_branch
        %242 = sbr.rel (%p240) target = $region20
      $region19: #{tpu_custom_call.1} parent=5 // pred_region
        // Predicated region
        $region21: #{tpu_custom_call.1} parent=19 // pred_check
          %p243 = pneg %p50
        $region22: #{tpu_custom_call.1} parent=19 // pred_check_branch
          %245 = sbr.rel (%p243) target = $region24
        $region23: #{tpu_custom_call.1} parent=19 // pred_region
          %p246 = scmp.lt.s32.totalorder %s23, 1
          %s247 = scalar_select %p246, %s23, 1
          %p248 = scmp.lt.s32.totalorder %s24, 1
          %s249 = scalar_select %p248, %s24, 1
          %s250 = smul.addr %s247, 2
          %s251 = sadd.s32 %s249, %s250
          %s252 = smul.addr %s251, 2
          %s253 = scalar_lea.vmem %s0, %s252
        $region24: #{tpu_custom_call.1} parent=19 // pred_fallthru
          _
        // Predicated region
        $region25: #{tpu_custom_call.1} parent=19 // pred_check
          %p254 = pneg %p78
        $region26: #{tpu_custom_call.1} parent=19 // pred_check_branch
          %256 = sbr.rel (%p254) target = $region28
        $region27: #{tpu_custom_call.1} parent=19 // pred_region
          %p257 = scmp.lt.s32.totalorder %s23, 1
          %s258 = scalar_select %p257, %s23, 1
          %p259 = scmp.lt.s32.totalorder %s24, 1
          %s260 = scalar_select %p259, %s24, 1
          %s261 = smul.addr %s258, 2
          %s262 = sadd.s32 %s260, %s261
          %s263 = smul.addr %s262, 2
          %s264 = scalar_lea.vmem %s1, %s263
        $region28: #{tpu_custom_call.1} parent=19 // pred_fallthru
          _
        // Predicated region
        $region29: #{tpu_custom_call.1} parent=19 // pred_check
          %p265 = pneg %p108
        $region30: #{tpu_custom_call.1} parent=19 // pred_check_branch
          %267 = sbr.rel (%p265) target = $region32
        $region31: #{tpu_custom_call.1} parent=19 // pred_region
          %s268 = sadd.s32 %s24, 1
          %p269 = scmp.lt.s32.totalorder %s23, 1
          %s270 = scalar_select %p269, %s23, 1
          %p271 = scmp.lt.s32.totalorder %s268, 1
          %s272 = scalar_select %p271, %s268, 1
          %s273 = smul.addr %s270, 2
          %s274 = sadd.s32 %s272, %s273
          %s275 = smul.addr %s274, 2
          %s276 = scalar_lea.vmem %s2, %s275
          %s277 = sadd.s32 %s24, 1
        $region32: #{tpu_custom_call.1} parent=19 // pred_fallthru
          _
        // Predicated region
        $region33: #{tpu_custom_call.1} parent=19 // pred_check
          %p278 = pneg %p138
        $region34: #{tpu_custom_call.1} parent=19 // pred_check_branch
          %280 = sbr.rel (%p278) target = $region36
        $region35: #{tpu_custom_call.1} parent=19 // pred_region
          %s281 = sadd.s32 %s24, 1
          %p282 = scmp.lt.s32.totalorder %s23, 1
          %s283 = scalar_select %p282, %s23, 1
          %p284 = scmp.lt.s32.totalorder %s281, 1
          %s285 = scalar_select %p284, %s281, 1
          %s286 = smul.addr %s283, 2
          %s287 = sadd.s32 %s285, %s286
          %s288 = smul.addr %s287, 2
          %s289 = scalar_lea.vmem %s3, %s288
          %s290 = sadd.s32 %s24, 1
        $region36: #{tpu_custom_call.1} parent=19 // pred_fallthru
          _
      $region20: #{tpu_custom_call.1} parent=5 // pred_fallthru
        _
      %p291 = scmp.le.s32.totalorder 1, %s16
      %p292 = scmp.lt.s32.totalorder %s16, 3
      %p293 = pnand %p291, %p292
      %p294 = pneg %p293
      // Predicated region
      $region37: #{tpu_custom_call.1} parent=5 // pred_check
        _
      $region38: #{tpu_custom_call.1} parent=5 // pred_check_branch
        %296 = sbr.rel (%p293) target = $region40
      $region39: #{tpu_custom_call.1} parent=5 // pred_region
        %s297 = ssub.s32 %s16, 1
        %p298 = scmp.lt.s32.totalorder %s25, 1
        %s299 = scalar_select %p298, %s25, 1
        %p300 = scmp.lt.s32.totalorder %s26, 1
        %s301 = scalar_select %p300, %s26, 1
        %s302 = smul.addr %s299, 2
        %s303 = sadd.s32 %s301, %s302
        %s304 = smul.addr %s303, 2
        %s305 = scalar_lea.vmem %s0, %s304
        %p306 = pneg %p56
        %p307 = pneg %p53
        %p308 = scmp.lt.s32.totalorder %s25, 1
        %s309 = scalar_select %p308, %s25, 1
        %p310 = scmp.lt.s32.totalorder %s26, 1
        %s311 = scalar_select %p310, %s26, 1
        %s312 = smul.addr %s309, 2
        %s313 = sadd.s32 %s311, %s312
        %s314 = smul.addr %s313, 2
        %s315 = scalar_lea.vmem %s1, %s314
        %p316 = pneg %p84
        %p317 = pneg %p81
        %s318 = sadd.s32 %s26, 1
        %p319 = scmp.lt.s32.totalorder %s25, 1
        %s320 = scalar_select %p319, %s25, 1
        %p321 = scmp.lt.s32.totalorder %s318, 1
        %s322 = scalar_select %p321, %s318, 1
        %s323 = smul.addr %s320, 2
        %s324 = sadd.s32 %s322, %s323
        %s325 = smul.addr %s324, 2
        %s326 = scalar_lea.vmem %s2, %s325
        %p327 = pneg %p114
        %p328 = pneg %p111
        %s329 = sadd.s32 %s26, 1
        %p330 = scmp.lt.s32.totalorder %s25, 1
        %s331 = scalar_select %p330, %s25, 1
        %p332 = scmp.lt.s32.totalorder %s329, 1
        %s333 = scalar_select %p332, %s329, 1
        %s334 = smul.addr %s331, 2
        %s335 = sadd.s32 %s333, %s334
        %s336 = smul.addr %s335, 2
        %s337 = scalar_lea.vmem %s3, %s336
        %p338 = pneg %p144
        %p339 = pneg %p141
        %p340 = pneg %p165
        %p341 = pneg %p162
        %p342 = pneg %p193
        %p343 = pneg %p190
        %s344 = sand.u32 %s180, 1
        %s345 = scalar_lea.sflag [#allocation3], %s344
        %s346 = sand.u32 %s180, 1
        %s347 = smul.addr %s346, 8
        %s348 = scalar_lea.vmem [#allocation2], %s347
        %p349 = pneg %p221
        %p350 = pneg %p218
        %p351 = scmp.lt.s32.totalorder %s25, 1
        %s352 = scalar_select %p351, %s25, 1
        %p353 = scmp.lt.s32.totalorder %s26, 0
        %s354 = scalar_select %p353, %s26, 0
        %s355 = sadd.s32 %s354, %s352
        %s356 = smul.addr %s355, 8
        %s357 = scalar_lea.vmem %s6, %s356
        %p358 = scmp.lt.s32.totalorder %s25, 1
        %s359 = scalar_select %p358, %s25, 1
        %p360 = scmp.lt.s32.totalorder %s26, 1
        %s361 = scalar_select %p360, %s26, 1
        %s362 = smul.addr %s359, 2
        %s363 = sadd.s32 %s361, %s362
        %s364 = smul.addr %s363, 2
        %s365 = scalar_lea.vmem %s0, %s364
        %p366 = scmp.lt.s32.totalorder %s25, 1
        %s367 = scalar_select %p366, %s25, 1
        %p368 = scmp.lt.s32.totalorder %s26, 1
        %s369 = scalar_select %p368, %s26, 1
        %s370 = smul.addr %s367, 2
        %s371 = sadd.s32 %s369, %s370
        %s372 = smul.addr %s371, 2
        %s373 = scalar_lea.vmem %s1, %s372
        %s374 = sadd.s32 %s26, 1
        %p375 = scmp.lt.s32.totalorder %s25, 1
        %s376 = scalar_select %p375, %s25, 1
        %p377 = scmp.lt.s32.totalorder %s374, 1
        %s378 = scalar_select %p377, %s374, 1
        %s379 = smul.addr %s376, 2
        %s380 = sadd.s32 %s378, %s379
        %s381 = smul.addr %s380, 2
        %s382 = scalar_lea.vmem %s2, %s381
        %s383 = sadd.s32 %s26, 1
        %s384 = sadd.s32 %s26, 1
        %p385 = scmp.lt.s32.totalorder %s25, 1
        %s386 = scalar_select %p385, %s25, 1
        %p387 = scmp.lt.s32.totalorder %s384, 1
        %s388 = scalar_select %p387, %s384, 1
        %s389 = smul.addr %s386, 2
        %s390 = sadd.s32 %s388, %s389
        %s391 = smul.addr %s390, 2
        %s392 = scalar_lea.vmem %s3, %s391
        %s393 = sadd.s32 %s26, 1
        %p394 = scmp.lt.s32.totalorder %s25, 1
        %s395 = scalar_select %p394, %s25, 1
        %p396 = scmp.lt.s32.totalorder %s26, 0
        %s397 = scalar_select %p396, %s26, 0
        %s398 = sadd.s32 %s397, %s395
        %s399 = smul.addr %s398, 8
        %s400 = scalar_lea.vmem %s6, %s399
        %401 = vst [vmem:[%s348] sm:$0xff] 0.0
        %v402 = vld [vmem:[%s365] sm:$0x3]
        %v403 = vld [vmem:[%s382] sm:$0x3]
        %v404 = vld [vmem:[%s4] sm:$0xff]
        %v405 = vld [vmem:[%s348] sm:$0xff]
        %vm406 = vcmask 15360
        %v408 = vsel %vm406, %v404, 0
        %vm410 = vcmask 1041408
        %v412 = vsel %vm410, %v402, 0
        %414 = vmatprep.subr.mxu0 0.0
        %415 = vmatpush1.msra.mxu0 0.0
        %416 = vmatprep.subr.mxu0 0.0
        %417 = vmatpush1.msra.mxu0 0.0
        %418 = vmatprep.subr.mxu0 0.0
        %419 = vmatpush1.msra.mxu0 0.0
        %420 = vmatprep.subr.mxu0 0.0
        %421 = vmatpush1.msra.mxu0 0.0
        %422 = vmatprep.subr.mxu0 0.0
        %423 = vmatpush1.msra.mxu0 0.0
        %424 = vmatprep.subr.mxu0 0.0
        %425 = vmatpush1.msra.mxu0 0.0
        %426 = vmatprep.subr.mxu0 0.0
        %427 = vmatpush1.msra.mxu0 0.0
        %428 = vmatprep.subr.mxu0 0.0
        %429 = vmatpush1.msra.mxu0 0.0
        %430 = vmatprep.subr.mxu0 0.0
        %431 = vmatpush1.msra.mxu0 0.0
        %432 = vmatprep.subr.mxu0 0.0
        %433 = vmatpush1.msra.mxu0 0.0
        %434 = vmatprep.subr.mxu0 0.0
        %435 = vmatpush1.msra.mxu0 0.0
        %436 = vmatprep.subr.mxu0 0.0
        %437 = vmatpush1.msra.mxu0 0.0
        %438 = vmatprep.subr.mxu0 0.0
        %439 = vmatpush1.msra.mxu0 0.0
        %440 = vmatprep.subr.mxu0 0.0
        %441 = vmatpush1.msra.mxu0 0.0
        %442 = vmatprep.subr.mxu0 0.0
        %443 = vmatpush1.msra.mxu0 0.0
        %444 = vmatprep.subr.mxu0 0.0
        %445 = vmatpush1.msra.mxu0 %v412
        %446 = vmatprep.subr.mxu0 0.0
        %447 = vmatpush2.msra.mxu0 0.0
        %448 = vmatprep.subr.mxu0 0.0
        %449 = vmatpush2.msra.mxu0 0.0
        %450 = vmatprep.subr.mxu0 0.0
        %451 = vmatpush2.msra.mxu0 0.0
        %452 = vmatprep.subr.mxu0 0.0
        %453 = vmatpush2.msra.mxu0 0.0
        %454 = vmatprep.subr.mxu0 0.0
        %455 = vmatpush2.msra.mxu0 0.0
        %456 = vmatprep.subr.mxu0 0.0
        %457 = vmatpush2.msra.mxu0 0.0
        %458 = vmatprep.subr.mxu0 0.0
        %459 = vmatpush2.msra.mxu0 0.0
        %460 = vmatprep.subr.mxu0 0.0
        %461 = vmatpush2.msra.mxu0 0.0
        %462 = vmatprep.subr.mxu0 0.0
        %463 = vmatpush2.msra.mxu0 0.0
        %464 = vmatprep.subr.mxu0 0.0
        %465 = vmatpush2.msra.mxu0 0.0
        %466 = vmatprep.subr.mxu0 0.0
        %467 = vmatpush2.msra.mxu0 0.0
        %468 = vmatprep.subr.mxu0 0.0
        %469 = vmatpush2.msra.mxu0 0.0
        %470 = vmatprep.subr.mxu0 0.0
        %471 = vmatpush2.msra.mxu0 0.0
        %472 = vmatprep.subr.mxu0 0.0
        %473 = vmatpush2.msra.mxu0 0.0
        %474 = vmatprep.subr.mxu0 0.0
        %475 = vmatpush2.msra.mxu0 0.0
        %476 = vmatprep.subr.mxu0 0.0
        %477 = vmatpush2.msra.mxu0 0.0
        %478 = vmatprep.mubr.f32.mxu0 0.0
        %479 = vmatmul.mubr.f32.gmra.mxu0 %v408
        %v480 = vpop.f32.mrf.mxu0
        %v481 = vadd.f32 0.0, %v480
        %v482 = vpop.f32.mrf.mxu0
        %483 = vdwg.mxu0
        %v484 = vadd.f32 %v405, %v481
        %485 = vst [vmem:[%s348] sm:$0xff] %v484
        %s486 = scalar_lea.vmem %s4, 8
        %v487 = vld [vmem:[%s486] sm:$0xff]
        %v488 = vld [vmem:[%s348] sm:$0xff]
        %490 = vrot.lane.b32.xlu0 %v402, 127
        %v491 = vpop.permute.xlu0 %490
        %492 = vrot.lane.b32.xlu0 %v403, 127
        %v493 = vpop.permute.xlu0 %492
        %vm494 = vcmask 1039360
        %v495 = vsel %vm494, %v491, %v493
        %v497 = vsel %vm406, %v487, 0
        %v499 = vsel %vm410, %v495, 0
        %501 = vmatprep.subr.mxu0 0.0
        %502 = vmatpush1.msra.mxu0 0.0
        %503 = vmatprep.subr.mxu0 0.0
        %504 = vmatpush1.msra.mxu0 0.0
        %505 = vmatprep.subr.mxu0 0.0
        %506 = vmatpush1.msra.mxu0 0.0
        %507 = vmatprep.subr.mxu0 0.0
        %508 = vmatpush1.msra.mxu0 0.0
        %509 = vmatprep.subr.mxu0 0.0
        %510 = vmatpush1.msra.mxu0 0.0
        %511 = vmatprep.subr.mxu0 0.0
        %512 = vmatpush1.msra.mxu0 0.0
        %513 = vmatprep.subr.mxu0 0.0
        %514 = vmatpush1.msra.mxu0 0.0
        %515 = vmatprep.subr.mxu0 0.0
        %516 = vmatpush1.msra.mxu0 0.0
        %517 = vmatprep.subr.mxu0 0.0
        %518 = vmatpush1.msra.mxu0 0.0
        %519 = vmatprep.subr.mxu0 0.0
        %520 = vmatpush1.msra.mxu0 0.0
        %521 = vmatprep.subr.mxu0 0.0
        %522 = vmatpush1.msra.mxu0 0.0
        %523 = vmatprep.subr.mxu0 0.0
        %524 = vmatpush1.msra.mxu0 0.0
        %525 = vmatprep.subr.mxu0 0.0
        %526 = vmatpush1.msra.mxu0 0.0
        %527 = vmatprep.subr.mxu0 0.0
        %528 = vmatpush1.msra.mxu0 0.0
        %529 = vmatprep.subr.mxu0 0.0
        %530 = vmatpush1.msra.mxu0 0.0
        %531 = vmatprep.subr.mxu0 0.0
        %532 = vmatpush1.msra.mxu0 %v499
        %533 = vmatprep.subr.mxu0 0.0
        %534 = vmatpush2.msra.mxu0 0.0
        %535 = vmatprep.subr.mxu0 0.0
        %536 = vmatpush2.msra.mxu0 0.0
        %537 = vmatprep.subr.mxu0 0.0
        %538 = vmatpush2.msra.mxu0 0.0
        %539 = vmatprep.subr.mxu0 0.0
        %540 = vmatpush2.msra.mxu0 0.0
        %541 = vmatprep.subr.mxu0 0.0
        %542 = vmatpush2.msra.mxu0 0.0
        %543 = vmatprep.subr.mxu0 0.0
        %544 = vmatpush2.msra.mxu0 0.0
        %545 = vmatprep.subr.mxu0 0.0
        %546 = vmatpush2.msra.mxu0 0.0
        %547 = vmatprep.subr.mxu0 0.0
        %548 = vmatpush2.msra.mxu0 0.0
        %549 = vmatprep.subr.mxu0 0.0
        %550 = vmatpush2.msra.mxu0 0.0
        %551 = vmatprep.subr.mxu0 0.0
        %552 = vmatpush2.msra.mxu0 0.0
        %553 = vmatprep.subr.mxu0 0.0
        %554 = vmatpush2.msra.mxu0 0.0
        %555 = vmatprep.subr.mxu0 0.0
        %556 = vmatpush2.msra.mxu0 0.0
        %557 = vmatprep.subr.mxu0 0.0
        %558 = vmatpush2.msra.mxu0 0.0
        %559 = vmatprep.subr.mxu0 0.0
        %560 = vmatpush2.msra.mxu0 0.0
        %561 = vmatprep.subr.mxu0 0.0
        %562 = vmatpush2.msra.mxu0 0.0
        %563 = vmatprep.subr.mxu0 0.0
        %564 = vmatpush2.msra.mxu0 0.0
        %565 = vmatprep.mubr.f32.mxu0 0.0
        %566 = vmatmul.mubr.f32.gmra.mxu0 %v497
        %v567 = vpop.f32.mrf.mxu0
        %v568 = vadd.f32 0.0, %v567
        %v569 = vpop.f32.mrf.mxu0
        %570 = vdwg.mxu0
        %v571 = vadd.f32 %v488, %v568
        %572 = vst [vmem:[%s348] sm:$0xff] %v571
        %s573 = scalar_lea.vmem %s4, 16
        %v574 = vld [vmem:[%s573] sm:$0xff]
        %v575 = vld [vmem:[%s348] sm:$0xff]
        %576 = vrot.lane.b32.xlu0 %v402, 126
        %v577 = vpop.permute.xlu0 %576
        %578 = vrot.lane.b32.xlu0 %v403, 126
        %v579 = vpop.permute.xlu0 %578
        %vm580 = vcmask 1031168
        %v581 = vsel %vm580, %v577, %v579
        %v583 = vsel %vm406, %v574, 0
        %v585 = vsel %vm410, %v581, 0
        %587 = vmatprep.subr.mxu0 0.0
        %588 = vmatpush1.msra.mxu0 0.0
        %589 = vmatprep.subr.mxu0 0.0
        %590 = vmatpush1.msra.mxu0 0.0
        %591 = vmatprep.subr.mxu0 0.0
        %592 = vmatpush1.msra.mxu0 0.0
        %593 = vmatprep.subr.mxu0 0.0
        %594 = vmatpush1.msra.mxu0 0.0
        %595 = vmatprep.subr.mxu0 0.0
        %596 = vmatpush1.msra.mxu0 0.0
        %597 = vmatprep.subr.mxu0 0.0
        %598 = vmatpush1.msra.mxu0 0.0
        %599 = vmatprep.subr.mxu0 0.0
        %600 = vmatpush1.msra.mxu0 0.0
        %601 = vmatprep.subr.mxu0 0.0
        %602 = vmatpush1.msra.mxu0 0.0
        %603 = vmatprep.subr.mxu0 0.0
        %604 = vmatpush1.msra.mxu0 0.0
        %605 = vmatprep.subr.mxu0 0.0
        %606 = vmatpush1.msra.mxu0 0.0
        %607 = vmatprep.subr.mxu0 0.0
        %608 = vmatpush1.msra.mxu0 0.0
        %609 = vmatprep.subr.mxu0 0.0
        %610 = vmatpush1.msra.mxu0 0.0
        %611 = vmatprep.subr.mxu0 0.0
        %612 = vmatpush1.msra.mxu0 0.0
        %613 = vmatprep.subr.mxu0 0.0
        %614 = vmatpush1.msra.mxu0 0.0
        %615 = vmatprep.subr.mxu0 0.0
        %616 = vmatpush1.msra.mxu0 0.0
        %617 = vmatprep.subr.mxu0 0.0
        %618 = vmatpush1.msra.mxu0 %v585
        %619 = vmatprep.subr.mxu0 0.0
        %620 = vmatpush2.msra.mxu0 0.0
        %621 = vmatprep.subr.mxu0 0.0
        %622 = vmatpush2.msra.mxu0 0.0
        %623 = vmatprep.subr.mxu0 0.0
        %624 = vmatpush2.msra.mxu0 0.0
        %625 = vmatprep.subr.mxu0 0.0
        %626 = vmatpush2.msra.mxu0 0.0
        %627 = vmatprep.subr.mxu0 0.0
        %628 = vmatpush2.msra.mxu0 0.0
        %629 = vmatprep.subr.mxu0 0.0
        %630 = vmatpush2.msra.mxu0 0.0
        %631 = vmatprep.subr.mxu0 0.0
        %632 = vmatpush2.msra.mxu0 0.0
        %633 = vmatprep.subr.mxu0 0.0
        %634 = vmatpush2.msra.mxu0 0.0
        %635 = vmatprep.subr.mxu0 0.0
        %636 = vmatpush2.msra.mxu0 0.0
        %637 = vmatprep.subr.mxu0 0.0
        %638 = vmatpush2.msra.mxu0 0.0
        %639 = vmatprep.subr.mxu0 0.0
        %640 = vmatpush2.msra.mxu0 0.0
        %641 = vmatprep.subr.mxu0 0.0
        %642 = vmatpush2.msra.mxu0 0.0
        %643 = vmatprep.subr.mxu0 0.0
        %644 = vmatpush2.msra.mxu0 0.0
        %645 = vmatprep.subr.mxu0 0.0
        %646 = vmatpush2.msra.mxu0 0.0
        %647 = vmatprep.subr.mxu0 0.0
        %648 = vmatpush2.msra.mxu0 0.0
        %649 = vmatprep.subr.mxu0 0.0
        %650 = vmatpush2.msra.mxu0 0.0
        %651 = vmatprep.mubr.f32.mxu0 0.0
        %652 = vmatmul.mubr.f32.gmra.mxu0 %v583
        %v653 = vpop.f32.mrf.mxu0
        %v654 = vadd.f32 0.0, %v653
        %v655 = vpop.f32.mrf.mxu0
        %656 = vdwg.mxu0
        %v657 = vadd.f32 %v575, %v654
        %658 = vst [vmem:[%s348] sm:$0xff] %v657
        %v659 = vld [vmem:[%s373] sm:$0x3]
        %v660 = vld [vmem:[%s392] sm:$0x3]
        %v661 = vld [vmem:[%s4] sm:$0xff]
        %v662 = vld [vmem:[%s348] sm:$0xff]
        %664 = vrot.lane.b32.xlu0 %v661, 126
        %v665 = vpop.permute.xlu0 %664
        %v666 = vsel %vm406, %v665, 0
        %v669 = vsel %vm410, %v659, 0
        %671 = vmatprep.subr.mxu0 0.0
        %672 = vmatpush1.msra.mxu0 0.0
        %673 = vmatprep.subr.mxu0 0.0
        %674 = vmatpush1.msra.mxu0 0.0
        %675 = vmatprep.subr.mxu0 0.0
        %676 = vmatpush1.msra.mxu0 0.0
        %677 = vmatprep.subr.mxu0 0.0
        %678 = vmatpush1.msra.mxu0 0.0
        %679 = vmatprep.subr.mxu0 0.0
        %680 = vmatpush1.msra.mxu0 0.0
        %681 = vmatprep.subr.mxu0 0.0
        %682 = vmatpush1.msra.mxu0 0.0
        %683 = vmatprep.subr.mxu0 0.0
        %684 = vmatpush1.msra.mxu0 0.0
        %685 = vmatprep.subr.mxu0 0.0
        %686 = vmatpush1.msra.mxu0 0.0
        %687 = vmatprep.subr.mxu0 0.0
        %688 = vmatpush1.msra.mxu0 0.0
        %689 = vmatprep.subr.mxu0 0.0
        %690 = vmatpush1.msra.mxu0 0.0
        %691 = vmatprep.subr.mxu0 0.0
        %692 = vmatpush1.msra.mxu0 0.0
        %693 = vmatprep.subr.mxu0 0.0
        %694 = vmatpush1.msra.mxu0 0.0
        %695 = vmatprep.subr.mxu0 0.0
        %696 = vmatpush1.msra.mxu0 0.0
        %697 = vmatprep.subr.mxu0 0.0
        %698 = vmatpush1.msra.mxu0 0.0
        %699 = vmatprep.subr.mxu0 0.0
        %700 = vmatpush1.msra.mxu0 0.0
        %701 = vmatprep.subr.mxu0 0.0
        %702 = vmatpush1.msra.mxu0 %v669
        %703 = vmatprep.subr.mxu0 0.0
        %704 = vmatpush2.msra.mxu0 0.0
        %705 = vmatprep.subr.mxu0 0.0
        %706 = vmatpush2.msra.mxu0 0.0
        %707 = vmatprep.subr.mxu0 0.0
        %708 = vmatpush2.msra.mxu0 0.0
        %709 = vmatprep.subr.mxu0 0.0
        %710 = vmatpush2.msra.mxu0 0.0
        %711 = vmatprep.subr.mxu0 0.0
        %712 = vmatpush2.msra.mxu0 0.0
        %713 = vmatprep.subr.mxu0 0.0
        %714 = vmatpush2.msra.mxu0 0.0
        %715 = vmatprep.subr.mxu0 0.0
        %716 = vmatpush2.msra.mxu0 0.0
        %717 = vmatprep.subr.mxu0 0.0
        %718 = vmatpush2.msra.mxu0 0.0
        %719 = vmatprep.subr.mxu0 0.0
        %720 = vmatpush2.msra.mxu0 0.0
        %721 = vmatprep.subr.mxu0 0.0
        %722 = vmatpush2.msra.mxu0 0.0
        %723 = vmatprep.subr.mxu0 0.0
        %724 = vmatpush2.msra.mxu0 0.0
        %725 = vmatprep.subr.mxu0 0.0
        %726 = vmatpush2.msra.mxu0 0.0
        %727 = vmatprep.subr.mxu0 0.0
        %728 = vmatpush2.msra.mxu0 0.0
        %729 = vmatprep.subr.mxu0 0.0
        %730 = vmatpush2.msra.mxu0 0.0
        %731 = vmatprep.subr.mxu0 0.0
        %732 = vmatpush2.msra.mxu0 0.0
        %733 = vmatprep.subr.mxu0 0.0
        %734 = vmatpush2.msra.mxu0 0.0
        %735 = vmatprep.mubr.f32.mxu0 0.0
        %736 = vmatmul.mubr.f32.gmra.mxu0 %v666
        %v737 = vpop.f32.mrf.mxu0
        %v738 = vadd.f32 0.0, %v737
        %v739 = vpop.f32.mrf.mxu0
        %740 = vdwg.mxu0
        %v741 = vadd.f32 %v662, %v738
        %742 = vst [vmem:[%s348] sm:$0xff] %v741
        %v743 = vld [vmem:[%s486] sm:$0xff]
        %v744 = vld [vmem:[%s348] sm:$0xff]
        %746 = vrot.lane.b32.xlu0 %v743, 126
        %v747 = vpop.permute.xlu0 %746
        %749 = vrot.lane.b32.xlu0 %v659, 127
        %v750 = vpop.permute.xlu0 %749
        %751 = vrot.lane.b32.xlu0 %v660, 127
        %v752 = vpop.permute.xlu0 %751
        %v753 = vsel %vm494, %v750, %v752
        %v754 = vsel %vm406, %v747, 0
        %v756 = vsel %vm410, %v753, 0
        %758 = vmatprep.subr.mxu0 0.0
        %759 = vmatpush1.msra.mxu0 0.0
        %760 = vmatprep.subr.mxu0 0.0
        %761 = vmatpush1.msra.mxu0 0.0
        %762 = vmatprep.subr.mxu0 0.0
        %763 = vmatpush1.msra.mxu0 0.0
        %764 = vmatprep.subr.mxu0 0.0
        %765 = vmatpush1.msra.mxu0 0.0
        %766 = vmatprep.subr.mxu0 0.0
        %767 = vmatpush1.msra.mxu0 0.0
        %768 = vmatprep.subr.mxu0 0.0
        %769 = vmatpush1.msra.mxu0 0.0
        %770 = vmatprep.subr.mxu0 0.0
        %771 = vmatpush1.msra.mxu0 0.0
        %772 = vmatprep.subr.mxu0 0.0
        %773 = vmatpush1.msra.mxu0 0.0
        %774 = vmatprep.subr.mxu0 0.0
        %775 = vmatpush1.msra.mxu0 0.0
        %776 = vmatprep.subr.mxu0 0.0
        %777 = vmatpush1.msra.mxu0 0.0
        %778 = vmatprep.subr.mxu0 0.0
        %779 = vmatpush1.msra.mxu0 0.0
        %780 = vmatprep.subr.mxu0 0.0
        %781 = vmatpush1.msra.mxu0 0.0
        %782 = vmatprep.subr.mxu0 0.0
        %783 = vmatpush1.msra.mxu0 0.0
        %784 = vmatprep.subr.mxu0 0.0
        %785 = vmatpush1.msra.mxu0 0.0
        %786 = vmatprep.subr.mxu0 0.0
        %787 = vmatpush1.msra.mxu0 0.0
        %788 = vmatprep.subr.mxu0 0.0
        %789 = vmatpush1.msra.mxu0 %v756
        %790 = vmatprep.subr.mxu0 0.0
        %791 = vmatpush2.msra.mxu0 0.0
        %792 = vmatprep.subr.mxu0 0.0
        %793 = vmatpush2.msra.mxu0 0.0
        %794 = vmatprep.subr.mxu0 0.0
        %795 = vmatpush2.msra.mxu0 0.0
        %796 = vmatprep.subr.mxu0 0.0
        %797 = vmatpush2.msra.mxu0 0.0
        %798 = vmatprep.subr.mxu0 0.0
        %799 = vmatpush2.msra.mxu0 0.0
        %800 = vmatprep.subr.mxu0 0.0
        %801 = vmatpush2.msra.mxu0 0.0
        %802 = vmatprep.subr.mxu0 0.0
        %803 = vmatpush2.msra.mxu0 0.0
        %804 = vmatprep.subr.mxu0 0.0
        %805 = vmatpush2.msra.mxu0 0.0
        %806 = vmatprep.subr.mxu0 0.0
        %807 = vmatpush2.msra.mxu0 0.0
        %808 = vmatprep.subr.mxu0 0.0
        %809 = vmatpush2.msra.mxu0 0.0
        %810 = vmatprep.subr.mxu0 0.0
        %811 = vmatpush2.msra.mxu0 0.0
        %812 = vmatprep.subr.mxu0 0.0
        %813 = vmatpush2.msra.mxu0 0.0
        %814 = vmatprep.subr.mxu0 0.0
        %815 = vmatpush2.msra.mxu0 0.0
        %816 = vmatprep.subr.mxu0 0.0
        %817 = vmatpush2.msra.mxu0 0.0
        %818 = vmatprep.subr.mxu0 0.0
        %819 = vmatpush2.msra.mxu0 0.0
        %820 = vmatprep.subr.mxu0 0.0
        %821 = vmatpush2.msra.mxu0 0.0
        %822 = vmatprep.mubr.f32.mxu0 0.0
        %823 = vmatmul.mubr.f32.gmra.mxu0 %v754
        %v824 = vpop.f32.mrf.mxu0
        %v825 = vadd.f32 0.0, %v824
        %v826 = vpop.f32.mrf.mxu0
        %827 = vdwg.mxu0
        %v828 = vadd.f32 %v744, %v825
        %829 = vst [vmem:[%s348] sm:$0xff] %v828
        %v830 = vld [vmem:[%s573] sm:$0xff]
        %v831 = vld [vmem:[%s348] sm:$0xff]
        %833 = vrot.lane.b32.xlu0 %v830, 126
        %v834 = vpop.permute.xlu0 %833
        %835 = vrot.lane.b32.xlu0 %v659, 126
        %v836 = vpop.permute.xlu0 %835
        %837 = vrot.lane.b32.xlu0 %v660, 126
        %v838 = vpop.permute.xlu0 %837
        %v839 = vsel %vm580, %v836, %v838
        %v840 = vsel %vm406, %v834, 0
        %v842 = vsel %vm410, %v839, 0
        %844 = vmatprep.subr.mxu0 0.0
        %845 = vmatpush1.msra.mxu0 0.0
        %846 = vmatprep.subr.mxu0 0.0
        %847 = vmatpush1.msra.mxu0 0.0
        %848 = vmatprep.subr.mxu0 0.0
        %849 = vmatpush1.msra.mxu0 0.0
        %850 = vmatprep.subr.mxu0 0.0
        %851 = vmatpush1.msra.mxu0 0.0
        %852 = vmatprep.subr.mxu0 0.0
        %853 = vmatpush1.msra.mxu0 0.0
        %854 = vmatprep.subr.mxu0 0.0
        %855 = vmatpush1.msra.mxu0 0.0
        %856 = vmatprep.subr.mxu0 0.0
        %857 = vmatpush1.msra.mxu0 0.0
        %858 = vmatprep.subr.mxu0 0.0
        %859 = vmatpush1.msra.mxu0 0.0
        %860 = vmatprep.subr.mxu0 0.0
        %861 = vmatpush1.msra.mxu0 0.0
        %862 = vmatprep.subr.mxu0 0.0
        %863 = vmatpush1.msra.mxu0 0.0
        %864 = vmatprep.subr.mxu0 0.0
        %865 = vmatpush1.msra.mxu0 0.0
        %866 = vmatprep.subr.mxu0 0.0
        %867 = vmatpush1.msra.mxu0 0.0
        %868 = vmatprep.subr.mxu0 0.0
        %869 = vmatpush1.msra.mxu0 0.0
        %870 = vmatprep.subr.mxu0 0.0
        %871 = vmatpush1.msra.mxu0 0.0
        %872 = vmatprep.subr.mxu0 0.0
        %873 = vmatpush1.msra.mxu0 0.0
        %874 = vmatprep.subr.mxu0 0.0
        %875 = vmatpush1.msra.mxu0 %v842
        %876 = vmatprep.subr.mxu0 0.0
        %877 = vmatpush2.msra.mxu0 0.0
        %878 = vmatprep.subr.mxu0 0.0
        %879 = vmatpush2.msra.mxu0 0.0
        %880 = vmatprep.subr.mxu0 0.0
        %881 = vmatpush2.msra.mxu0 0.0
        %882 = vmatprep.subr.mxu0 0.0
        %883 = vmatpush2.msra.mxu0 0.0
        %884 = vmatprep.subr.mxu0 0.0
        %885 = vmatpush2.msra.mxu0 0.0
        %886 = vmatprep.subr.mxu0 0.0
        %887 = vmatpush2.msra.mxu0 0.0
        %888 = vmatprep.subr.mxu0 0.0
        %889 = vmatpush2.msra.mxu0 0.0
        %890 = vmatprep.subr.mxu0 0.0
        %891 = vmatpush2.msra.mxu0 0.0
        %892 = vmatprep.subr.mxu0 0.0
        %893 = vmatpush2.msra.mxu0 0.0
        %894 = vmatprep.subr.mxu0 0.0
        %895 = vmatpush2.msra.mxu0 0.0
        %896 = vmatprep.subr.mxu0 0.0
        %897 = vmatpush2.msra.mxu0 0.0
        %898 = vmatprep.subr.mxu0 0.0
        %899 = vmatpush2.msra.mxu0 0.0
        %900 = vmatprep.subr.mxu0 0.0
        %901 = vmatpush2.msra.mxu0 0.0
        %902 = vmatprep.subr.mxu0 0.0
        %903 = vmatpush2.msra.mxu0 0.0
        %904 = vmatprep.subr.mxu0 0.0
        %905 = vmatpush2.msra.mxu0 0.0
        %906 = vmatprep.subr.mxu0 0.0
        %907 = vmatpush2.msra.mxu0 0.0
        %908 = vmatprep.mubr.f32.mxu0 0.0
        %909 = vmatmul.mubr.f32.gmra.mxu0 %v840
        %v910 = vpop.f32.mrf.mxu0
        %v911 = vadd.f32 0.0, %v910
        %v912 = vpop.f32.mrf.mxu0
        %913 = vdwg.mxu0
        %v914 = vadd.f32 %v831, %v911
        %915 = vst [vmem:[%s348] sm:$0xff] %v914
        %v916 = vld [vmem:[%s348] sm:$0xff]
        %s917 = smul.u32 %s26, 128
        %v918 = vlaneseq
        %v919 = vand.u32 %v918, 127
        %v920 = vstv %s917
        %v921 = vadd.s32 %v920, %v919
        %vm922 = vcmp.lt.s32.totalorder %v921, 16
        %v923 = vsel %vm922, 1, 0
        %vm924 = vcmp.eq.s32.totalorder %v923, 1
        %v925 = vsel %vm924, %v916, 0.0
        %926 = vadd.xlane.f32.xlu0 %v925
        %v927 = vpop.xlane.xlu0 %926
        %v928 = vmul.f32 %v925, %v925
        %929 = vadd.xlane.f32.xlu0 %v928
        %v930 = vpop.xlane.xlu0 %929
        %vm931 = vcmask 7168
        %v932 = vsel %vm931, %v927, %v930
        %933 = vst.msk [vmem:[%s400] sm:$0xff] %vm406, %v932
        %s934 = sand.u32 %s180, 1
        %s935 = scalar_lea.sflag [#allocation3], %s934
        %s936 = sand.u32 %s180, 1
        %s937 = smul.addr %s936, 8
        %s938 = scalar_lea.vmem [#allocation2], %s937
        %p939 = scmp.lt.s32.totalorder %s25, 1
        %s940 = scalar_select %p939, %s25, 1
        %p941 = scmp.lt.s32.totalorder %s26, 0
        %s942 = scalar_select %p941, %s26, 0
        %s943 = sadd.s32 %s942, %s940
        %s944 = smul.addr %s943, 8
        %s945 = scalar_lea.vmem %s6, %s944
        // Predicated region
        $region41: #{tpu_custom_call.1} parent=39 // pred_check
          %p946 = pneg %p190
        $region42: #{tpu_custom_call.1} parent=39 // pred_check_branch
          %948 = sbr.rel (%p946) target = $region44
        $region43: #{tpu_custom_call.1} parent=39 // pred_region
          %s950 = ssub.s32 128, 128
          %951 = vsyncadd %s935, %s950
          %s952 = sadd.s32 %s26, %s25
          %s953 = smul.addr %s952, 128
          %s954 = scalar_lea.hbm %s5, %s953
          %s956 = sshll.u32 %s938, 4
          %s957 = int_to_ptr.vmem [resolvable:$true] %s956
          %959 = dma.vmem_to_hbm [thread:$0]  %s957, 128, %s954, %s935
        $region44: #{tpu_custom_call.1} parent=39 // pred_fallthru
          _
        // Predicated region
        $region45: #{tpu_custom_call.1} parent=39 // pred_check
          %p960 = pneg %p218
        $region46: #{tpu_custom_call.1} parent=39 // pred_check_branch
          %962 = sbr.rel (%p960) target = $region48
        $region47: #{tpu_custom_call.1} parent=39 // pred_region
          _
        $region48: #{tpu_custom_call.1} parent=39 // pred_fallthru
          _
      $region40: #{tpu_custom_call.1} parent=5 // pred_fallthru
        _
      %p963 = scmp.le.s32.totalorder 2, %s16
      // Predicated region
      $region49: #{tpu_custom_call.1} parent=5 // pred_check
        %p964 = pneg %p963
      $region50: #{tpu_custom_call.1} parent=5 // pred_check_branch
        %966 = sbr.rel (%p964) target = $region52
      $region51: #{tpu_custom_call.1} parent=5 // pred_region
        %s967 = ssub.s32 %s16, 2
        // Predicated region
        $region53: #{tpu_custom_call.1} parent=51 // pred_check
          %p968 = pneg %p196
        $region54: #{tpu_custom_call.1} parent=51 // pred_check_branch
          %970 = sbr.rel (%p968) target = $region56
        $region55: #{tpu_custom_call.1} parent=51 // pred_region
          %s971 = sand.u32 %s181, 1
          %s972 = scalar_lea.sflag [#allocation3], %s971
          %s973 = sand.u32 %s181, 1
          %s974 = smul.addr %s973, 8
          %s975 = scalar_lea.vmem [#allocation2], %s974
          %976 = dma.done %s972, 128
        $region56: #{tpu_custom_call.1} parent=51 // pred_fallthru
          _
        // Predicated region
        $region57: #{tpu_custom_call.1} parent=51 // pred_check
          %p977 = pneg %p224
        $region58: #{tpu_custom_call.1} parent=51 // pred_check_branch
          %979 = sbr.rel (%p977) target = $region60
        $region59: #{tpu_custom_call.1} parent=51 // pred_region
          %p980 = scmp.lt.s32.totalorder %s27, 1
          %s981 = scalar_select %p980, %s27, 1
          %p982 = scmp.lt.s32.totalorder %s28, 0
          %s983 = scalar_select %p982, %s28, 0
          %s984 = sadd.s32 %s983, %s981
          %s985 = smul.addr %s984, 8
          %s986 = scalar_lea.vmem %s6, %s985
        $region60: #{tpu_custom_call.1} parent=51 // pred_fallthru
          _
      $region52: #{tpu_custom_call.1} parent=5 // pred_fallthru
        _
    $region6: #{tpu_custom_call.1} parent=1 // loop_footer
      %s20 = sadd.s32 1, %s16
    $region7: #{tpu_custom_call.1} parent=1 // loop_footer_branch
      %15 = sbr.rel target = $region3
    $region8: #{tpu_custom_call.1} parent=1 // loop_exit
      _
    %987 = vsyncpa [#allocation3], 1
    %s988 = scalar_lea.sflag [#allocation3], 1
    %989 = vsyncpa %s988, 1

</llo_original>
